<compile_context>
chip_gen: v6e
topology: v6e:2x2x1
jax: 0.10.0
libtpu: 0.0.40
codegen_flags: <defaults>
</compile_context>

<pallas_src>
from functools import partial

import numpy as np

import jax
import jax.numpy as jnp
from jax.experimental import pallas as pl
from jax.experimental.pallas import tpu as pltpu

EPS = 1e-5  # PyTorch InstanceNorm2d default


def _conv_in_relu_kernel(x_ref, w_ref, m_ref, o_ref, *,
                         HW, taps_off, bN, mxu_dtype, eps):
    """Fused conv3x3 + InstanceNorm2d(affine=False) + ReLU, lane-dense layout.

    x_ref : (bN, Cin_p, HW + 2*halo)  f32  halo-padded, flattened (C, H*W) input
    w_ref : (Cout, K*K*Cin_p)         f32  2-D weight slab (tap-major, channel-minor)
    m_ref : (K*K*Cin_p, HW)           f32  0/1 halo-validity mask per im2col row
    o_ref : (bN, Cout, HW)            f32  lane-dense output (unmasked vst)
    """
    w2d = w_ref[...].astype(mxu_dtype)    # resident across grid steps (constant index_map)
    mask = m_ref[...]                     # resident halo mask (f32)

    for b in range(bN):                   # small static batch chunk, unrolled
        xp = x_ref[b]                     # (Cin_p, HW + 2*halo) f32
        # 9 shifted views = static lane slices of the halo-padded slab.
        taps = [xp[:, off:off + HW] for off in taps_off]
        # im2col slab: tile-aligned sublane concat (Cin_p is a multiple of 8),
        # zero the out-of-image taps with the resident mask, cast once for the MXU.
        cols = (jnp.concatenate(taps, axis=0) * mask).astype(mxu_dtype)   # (K*K*Cin_p, HW)
        # Single MXU matmul, contraction depth K*K*Cin_p, f32 accumulation.
        acc = jnp.dot(w2d, cols, preferred_element_type=jnp.float32)      # (Cout, HW) f32
        # InstanceNorm2d(affine=False): per-(instance, channel) stats over H*W lanes,
        # biased variance, eps inside rsqrt -> matches PyTorch semantics.
        mean = jnp.mean(acc, axis=1, keepdims=True)
        var = jnp.mean(jnp.square(acc - mean), axis=1, keepdims=True)
        y = (acc - mean) * jax.lax.rsqrt(var + eps)
        # ReLU + single lane-dense store (no f32 scratch spills).
        o_ref[b] = jnp.maximum(y, 0.0).astype(o_ref.dtype)


def conv_norm_act(x_nchw, weight, *, kernel_size=3, stride=1, dilation=1, groups=1,
                  batch_block=1, mxu_dtype=jnp.bfloat16, eps=EPS):
    """x_nchw: (N, Cin, H, W) f32;  weight: (Cout, Cin, K, K) f32 (PyTorch layout)."""
    assert stride == 1 and dilation == 1 and groups == 1, "only the module defaults are implemented"
    N, Cin, H, W = x_nchw.shape
    Cout, Cin_w, K, K2 = weight.shape
    assert Cin == Cin_w and K == K2 == kernel_size
    assert K % 2 == 1, "symmetric SAME-style halo assumes odd kernel_size"
    pad = (K - 1) // 2
    HW = H * W
    halo = pad * (W + 1)                 # 1-D halo on the flattened H*W axis
    HWp = HW + 2 * halo
    Cin_p = -(-Cin // 8) * 8             # round channels up to the f32 sublane tile
    KKC = K * K * Cin_p
    bN = batch_block
    assert N % bN == 0, "batch_block must divide N"

    # ---- cheap glue (no transposes of the activation tensor) -----------------------
    # NCHW is already (C, H*W)-major: reshape is a free view, pad is a tiny 1-D halo
    # plus sublane-rounding of the channel axis.
    x2d = jnp.pad(x_nchw.reshape(N, Cin, HW),
                  ((0, 0), (0, Cin_p - Cin), (halo, halo)))
    # weight -> one 2-D (Cout, K*K*Cin_p) slab matching the im2col row order.
    w2d = jnp.pad(jnp.transpose(weight, (0, 2, 3, 1)),            # (Cout, K, K, Cin)
                  ((0, 0), (0, 0), (0, 0), (0, Cin_p - Cin)),
                  ).reshape(Cout, KKC)
    # 0/1 halo-validity mask per im2col row (host-side constant, DMA'd once).
    hh, ww = np.meshgrid(np.arange(H), np.arange(W), indexing="ij")
    mrows = []
    for kh in range(K):
        for kw in range(K):
            dh, dw = kh - pad, kw - pad
            valid = ((hh + dh >= 0) & (hh + dh < H) &
                     (ww + dw >= 0) & (ww + dw < W)).reshape(-1)
            mrows.append(np.broadcast_to(valid, (Cin_p, HW)))
    mask = jnp.asarray(np.concatenate(mrows, axis=0).astype(np.float32))   # (KKC, HW)

    # static lane offsets of the 9 shifted views inside the halo-padded slab
    taps_off = tuple(halo + (kh - pad) * W + (kw - pad)
                     for kh in range(K) for kw in range(K))

    kernel = partial(_conv_in_relu_kernel, HW=HW, taps_off=taps_off,
                     bN=bN, mxu_dtype=mxu_dtype, eps=eps)

    # VMEM budget: double-buffered in/out blocks + resident weight/mask + im2col temp.
    in_bytes = bN * Cin_p * HWp * 4
    out_bytes = bN * Cout * HW * 4
    resident_bytes = (Cout * KKC + KKC * HW) * 4
    cols_bytes = KKC * HW * 4
    vmem_limit = int(min(32 * 1024 * 1024,
                         max(8 * 1024 * 1024,
                             4 * (in_bytes + out_bytes + resident_bytes + cols_bytes))))

    out2d = pl.pallas_call(
        kernel,
        out_shape=jax.ShapeDtypeStruct((N, Cout, HW), x_nchw.dtype),
        grid_spec=pltpu.PrefetchScalarGridSpec(
            num_scalar_prefetch=0,
            grid=(N // bN,),                    # batch-parallel grid (>=2 steps feeds both v7x TCs)
            in_specs=[
                pl.BlockSpec((bN, Cin_p, HWp), lambda n: (n, 0, 0)),
                pl.BlockSpec((Cout, KKC), lambda n: (0, 0)),     # resident weights
                pl.BlockSpec((KKC, HW), lambda n: (0, 0)),       # resident halo mask
            ],
            out_specs=pl.BlockSpec((bN, Cout, HW), lambda n: (n, 0, 0)),
        ),
        compiler_params=pltpu.CompilerParams(
            dimension_semantics=("parallel",),
            vmem_limit_bytes=vmem_limit,
        ),
    )(x2d, w2d, mask)

    # free view back to (N, Cout, H, W) — output was computed directly in NCHW order
    return out2d.reshape(N, Cout, H, W)


def _reference(x_nchw, weight, eps=EPS):
    """Pure-JAX reference (conv + instance norm + relu)."""
    y = jax.lax.conv_general_dilated(
        x_nchw, weight, window_strides=(1, 1), padding="SAME",
        dimension_numbers=("NCHW", "OIHW", "NCHW"))
    mean = jnp.mean(y, axis=(2, 3), keepdims=True)
    var = jnp.mean((y - mean) ** 2, axis=(2, 3), keepdims=True)
    y = (y - mean) * jax.lax.rsqrt(var + eps)
    return jnp.maximum(y, 0.0)


if __name__ == "__main__":
    # ConvNormAct(in_channels=4, out_channels=8, kernel_size=3)
    N, Cin, H, W = 2, 4, 16, 16
    Cout, K = 8, 3

    key = jax.random.PRNGKey(0)
    kx, kw = jax.random.split(key)
    x = jax.random.normal(kx, (N, Cin, H, W), dtype=jnp.float32)
    # deterministic conv weight (kaiming-uniform-like scale); no bias because the
    # normalization is InstanceNorm2d (use_bias=False in the module).
    fan_in = Cin * K * K
    bound = (1.0 / fan_in) ** 0.5
    weight = jax.random.uniform(kw, (Cout, Cin, K, K), jnp.float32,
                                minval=-bound, maxval=bound)

    ref = _reference(x, weight)

    # 1) exact-semantics check: f32 MXU path, batch chunk of 2 (exercises the chunk loop)
    out_f32 = jax.block_until_ready(
        conv_norm_act(x, weight, kernel_size=K, mxu_dtype=jnp.float32, batch_block=2))
    assert out_f32.shape == (N, Cout, H, W)
    assert jnp.allclose(out_f32, ref, atol=1e-4, rtol=1e-4), \
        float(jnp.max(jnp.abs(out_f32 - ref)))

    # 2) performance path: bf16 MXU operands (f32 accumulation + f32 norm stats),
    #    one instance per grid step -> parallel axis of extent 2.
    out_bf16 = jax.block_until_ready(conv_norm_act(x, weight, kernel_size=K))
    assert out_bf16.shape == (N, Cout, H, W)
    assert jnp.allclose(out_bf16, ref, atol=5e-2, rtol=5e-2), \
        float(jnp.max(jnp.abs(out_bf16 - ref)))

    print("KERNEL_OK")
</pallas_src>

<mosaic_0001>
module attributes {stable_mosaic.version = 11 : i64} {
  func.func @_conv_in_relu_kernel(%arg0: i32, %arg1: memref<2x8x290xf32, #tpu.memory_space<vmem>>, %arg2: memref<8x72xf32, #tpu.memory_space<vmem>>, %arg3: memref<72x256xf32, #tpu.memory_space<vmem>>, %arg4: memref<2x8x256xf32, #tpu.memory_space<vmem>>) attributes {dimension_semantics = [#tpu.dimension_semantics<parallel>], iteration_bounds = array<i64: 1>, scalar_prefetch = 0 : i64, scratch_operands = 0 : i64, tpu.core_type = #tpu.core_type<tc>, window_params = [{transform_indices = @transform_0, window_bounds = array<i64: 2, 8, 290>}, {pipeline_mode = #tpu.pipeline_mode<synchronous>, transform_indices = @transform_1, window_bounds = array<i64: 8, 72>}, {pipeline_mode = #tpu.pipeline_mode<synchronous>, transform_indices = @transform_2, window_bounds = array<i64: 72, 256>}, {transform_indices = @transform_3, window_bounds = array<i64: 2, 8, 256>}]} {
    %c0 = arith.constant 0 : index
    %c0_0 = arith.constant 0 : index
    %0 = vector.load %arg2[%c0, %c0_0] : memref<8x72xf32, #tpu.memory_space<vmem>>, vector<8x72xf32>
    %c0_1 = arith.constant 0 : index
    %c0_2 = arith.constant 0 : index
    %1 = vector.load %arg3[%c0_1, %c0_2] : memref<72x256xf32, #tpu.memory_space<vmem>>, vector<72x256xf32>
    %c0_3 = arith.constant 0 : index
    %c0_4 = arith.constant 0 : index
    %c0_5 = arith.constant 0 : index
    %2 = vector.load %arg1[%c0_3, %c0_4, %c0_5] : memref<2x8x290xf32, #tpu.memory_space<vmem>>, vector<1x8x290xf32>
    %3 = vector.shape_cast %2 : vector<1x8x290xf32> to vector<8x290xf32>
    %4 = vector.extract_strided_slice %3 {offsets = [0, 0], sizes = [8, 256], strides = [1, 1]} : vector<8x290xf32> to vector<8x256xf32>
    %5 = vector.extract_strided_slice %3 {offsets = [0, 1], sizes = [8, 256], strides = [1, 1]} : vector<8x290xf32> to vector<8x256xf32>
    %6 = vector.extract_strided_slice %3 {offsets = [0, 2], sizes = [8, 256], strides = [1, 1]} : vector<8x290xf32> to vector<8x256xf32>
    %7 = vector.extract_strided_slice %3 {offsets = [0, 16], sizes = [8, 256], strides = [1, 1]} : vector<8x290xf32> to vector<8x256xf32>
    %8 = vector.extract_strided_slice %3 {offsets = [0, 17], sizes = [8, 256], strides = [1, 1]} : vector<8x290xf32> to vector<8x256xf32>
    %9 = vector.extract_strided_slice %3 {offsets = [0, 18], sizes = [8, 256], strides = [1, 1]} : vector<8x290xf32> to vector<8x256xf32>
    %10 = vector.extract_strided_slice %3 {offsets = [0, 32], sizes = [8, 256], strides = [1, 1]} : vector<8x290xf32> to vector<8x256xf32>
    %11 = vector.extract_strided_slice %3 {offsets = [0, 33], sizes = [8, 256], strides = [1, 1]} : vector<8x290xf32> to vector<8x256xf32>
    %12 = vector.extract_strided_slice %3 {offsets = [0, 34], sizes = [8, 256], strides = [1, 1]} : vector<8x290xf32> to vector<8x256xf32>
    %13 = tpu.concatenate %4, %5, %6, %7, %8, %9, %10, %11, %12 in 0 : vector<8x256xf32>, vector<8x256xf32>, vector<8x256xf32>, vector<8x256xf32>, vector<8x256xf32>, vector<8x256xf32>, vector<8x256xf32>, vector<8x256xf32>, vector<8x256xf32> -> vector<72x256xf32>
    %14 = arith.mulf %13, %1 : vector<72x256xf32>
    %cst = arith.constant dense<0.000000e+00> : vector<8x256xf32>
    %15 = tpu.matmul %0, %14, %cst {dimension_numbers = #tpu.dot_dimension_numbers<[1], [0], [0], [1], [0, 0, 1, 1], [], []>} : vector<8x72xf32>, vector<72x256xf32>, vector<8x256xf32> -> vector<8x256xf32>
    %cst_6 = arith.constant dense<0.000000e+00> : vector<8xf32>
    %16 = vector.multi_reduction <add>, %15, %cst_6 [1] : vector<8x256xf32> to vector<8xf32>
    %17 = vector.shape_cast %16 : vector<8xf32> to vector<8x1xf32>
    %cst_7 = arith.constant 2.560000e+02 : f32
    %18 = vector.broadcast %cst_7 : f32 to vector<8x1xf32>
    %19 = arith.divf %17, %18 : vector<8x1xf32>
    %20 = vector.broadcast %19 : vector<8x1xf32> to vector<8x256xf32>
    %21 = arith.subf %15, %20 : vector<8x256xf32>
    %22 = arith.mulf %21, %21 : vector<8x256xf32>
    %cst_8 = arith.constant dense<0.000000e+00> : vector<8xf32>
    %23 = vector.multi_reduction <add>, %22, %cst_8 [1] : vector<8x256xf32> to vector<8xf32>
    %24 = vector.shape_cast %23 : vector<8xf32> to vector<8x1xf32>
    %cst_9 = arith.constant 2.560000e+02 : f32
    %25 = vector.broadcast %cst_9 : f32 to vector<8x1xf32>
    %26 = arith.divf %24, %25 : vector<8x1xf32>
    %27 = vector.broadcast %19 : vector<8x1xf32> to vector<8x256xf32>
    %28 = arith.subf %15, %27 : vector<8x256xf32>
    %cst_10 = arith.constant 9.99999974E-6 : f32
    %29 = vector.broadcast %cst_10 : f32 to vector<8x1xf32>
    %30 = arith.addf %26, %29 : vector<8x1xf32>
    %31 = math.rsqrt %30 : vector<8x1xf32>
    %32 = vector.broadcast %31 : vector<8x1xf32> to vector<8x256xf32>
    %33 = arith.mulf %28, %32 : vector<8x256xf32>
    %cst_11 = arith.constant 0.000000e+00 : f32
    %34 = vector.broadcast %cst_11 : f32 to vector<8x256xf32>
    %35 = arith.maximumf %33, %34 : vector<8x256xf32>
    %c0_12 = arith.constant 0 : index
    %c0_13 = arith.constant 0 : index
    %c0_14 = arith.constant 0 : index
    %36 = vector.load %arg4[%c0_12, %c0_13, %c0_14] : memref<2x8x256xf32, #tpu.memory_space<vmem>>, vector<1x8x256xf32>
    %37 = vector.shape_cast %36 : vector<1x8x256xf32> to vector<8x256xf32>
    %38 = vector.shape_cast %35 : vector<8x256xf32> to vector<1x8x256xf32>
    tpu.vector_store %arg4[%c0_12, %c0_13, %c0_14], %38 {strides = array<i32>} : memref<2x8x256xf32, #tpu.memory_space<vmem>>, vector<1x8x256xf32>,
    %c1 = arith.constant 1 : index
    %c0_15 = arith.constant 0 : index
    %c0_16 = arith.constant 0 : index
    %39 = vector.load %arg1[%c1, %c0_15, %c0_16] : memref<2x8x290xf32, #tpu.memory_space<vmem>>, vector<1x8x290xf32>
    %40 = vector.shape_cast %39 : vector<1x8x290xf32> to vector<8x290xf32>
    %41 = vector.extract_strided_slice %40 {offsets = [0, 0], sizes = [8, 256], strides = [1, 1]} : vector<8x290xf32> to vector<8x256xf32>
    %42 = vector.extract_strided_slice %40 {offsets = [0, 1], sizes = [8, 256], strides = [1, 1]} : vector<8x290xf32> to vector<8x256xf32>
    %43 = vector.extract_strided_slice %40 {offsets = [0, 2], sizes = [8, 256], strides = [1, 1]} : vector<8x290xf32> to vector<8x256xf32>
    %44 = vector.extract_strided_slice %40 {offsets = [0, 16], sizes = [8, 256], strides = [1, 1]} : vector<8x290xf32> to vector<8x256xf32>
    %45 = vector.extract_strided_slice %40 {offsets = [0, 17], sizes = [8, 256], strides = [1, 1]} : vector<8x290xf32> to vector<8x256xf32>
    %46 = vector.extract_strided_slice %40 {offsets = [0, 18], sizes = [8, 256], strides = [1, 1]} : vector<8x290xf32> to vector<8x256xf32>
    %47 = vector.extract_strided_slice %40 {offsets = [0, 32], sizes = [8, 256], strides = [1, 1]} : vector<8x290xf32> to vector<8x256xf32>
    %48 = vector.extract_strided_slice %40 {offsets = [0, 33], sizes = [8, 256], strides = [1, 1]} : vector<8x290xf32> to vector<8x256xf32>
    %49 = vector.extract_strided_slice %40 {offsets = [0, 34], sizes = [8, 256], strides = [1, 1]} : vector<8x290xf32> to vector<8x256xf32>
    %50 = tpu.concatenate %41, %42, %43, %44, %45, %46, %47, %48, %49 in 0 : vector<8x256xf32>, vector<8x256xf32>, vector<8x256xf32>, vector<8x256xf32>, vector<8x256xf32>, vector<8x256xf32>, vector<8x256xf32>, vector<8x256xf32>, vector<8x256xf32> -> vector<72x256xf32>
    %51 = arith.mulf %50, %1 : vector<72x256xf32>
    %cst_17 = arith.constant dense<0.000000e+00> : vector<8x256xf32>
    %52 = tpu.matmul %0, %51, %cst_17 {dimension_numbers = #tpu.dot_dimension_numbers<[1], [0], [0], [1], [0, 0, 1, 1], [], []>} : vector<8x72xf32>, vector<72x256xf32>, vector<8x256xf32> -> vector<8x256xf32>
    %cst_18 = arith.constant dense<0.000000e+00> : vector<8xf32>
    %53 = vector.multi_reduction <add>, %52, %cst_18 [1] : vector<8x256xf32> to vector<8xf32>
    %54 = vector.shape_cast %53 : vector<8xf32> to vector<8x1xf32>
    %cst_19 = arith.constant 2.560000e+02 : f32
    %55 = vector.broadcast %cst_19 : f32 to vector<8x1xf32>
    %56 = arith.divf %54, %55 : vector<8x1xf32>
    %57 = vector.broadcast %56 : vector<8x1xf32> to vector<8x256xf32>
    %58 = arith.subf %52, %57 : vector<8x256xf32>
    %59 = arith.mulf %58, %58 : vector<8x256xf32>
    %cst_20 = arith.constant dense<0.000000e+00> : vector<8xf32>
    %60 = vector.multi_reduction <add>, %59, %cst_20 [1] : vector<8x256xf32> to vector<8xf32>
    %61 = vector.shape_cast %60 : vector<8xf32> to vector<8x1xf32>
    %cst_21 = arith.constant 2.560000e+02 : f32
    %62 = vector.broadcast %cst_21 : f32 to vector<8x1xf32>
    %63 = arith.divf %61, %62 : vector<8x1xf32>
    %64 = vector.broadcast %56 : vector<8x1xf32> to vector<8x256xf32>
    %65 = arith.subf %52, %64 : vector<8x256xf32>
    %cst_22 = arith.constant 9.99999974E-6 : f32
    %66 = vector.broadcast %cst_22 : f32 to vector<8x1xf32>
    %67 = arith.addf %63, %66 : vector<8x1xf32>
    %68 = math.rsqrt %67 : vector<8x1xf32>
    %69 = vector.broadcast %68 : vector<8x1xf32> to vector<8x256xf32>
    %70 = arith.mulf %65, %69 : vector<8x256xf32>
    %cst_23 = arith.constant 0.000000e+00 : f32
    %71 = vector.broadcast %cst_23 : f32 to vector<8x256xf32>
    %72 = arith.maximumf %70, %71 : vector<8x256xf32>
    %c1_24 = arith.constant 1 : index
    %c0_25 = arith.constant 0 : index
    %c0_26 = arith.constant 0 : index
    %73 = vector.load %arg4[%c1_24, %c0_25, %c0_26] : memref<2x8x256xf32, #tpu.memory_space<vmem>>, vector<1x8x256xf32>
    %74 = vector.shape_cast %73 : vector<1x8x256xf32> to vector<8x256xf32>
    %75 = vector.shape_cast %72 : vector<8x256xf32> to vector<1x8x256xf32>
    tpu.vector_store %arg4[%c1_24, %c0_25, %c0_26], %75 {strides = array<i32>} : memref<2x8x256xf32, #tpu.memory_space<vmem>>, vector<1x8x256xf32>,
    return
  }
  func.func @transform_0(%arg0: i32) -> (i32, i32, i32) {
    %c0_i32 = arith.constant 0 : i32
    %c0_i32_0 = arith.constant 0 : i32
    %c0_i32_1 = arith.constant 0 : i32
    return %arg0, %c0_i32, %c0_i32_0 : i32, i32, i32
  }
  func.func @transform_1(%arg0: i32) -> (i32, i32) {
    %c0_i32 = arith.constant 0 : i32
    %c0_i32_0 = arith.constant 0 : i32
    %c0_i32_1 = arith.constant 0 : i32
    return %c0_i32, %c0_i32_0 : i32, i32
  }
  func.func @transform_2(%arg0: i32) -> (i32, i32) {
    %c0_i32 = arith.constant 0 : i32
    %c0_i32_0 = arith.constant 0 : i32
    %c0_i32_1 = arith.constant 0 : i32
    return %c0_i32, %c0_i32_0 : i32, i32
  }
  func.func @transform_3(%arg0: i32) -> (i32, i32, i32) {
    %c0_i32 = arith.constant 0 : i32
    %c0_i32_0 = arith.constant 0 : i32
    %c0_i32_1 = arith.constant 0 : i32
    return %arg0, %c0_i32, %c0_i32_0 : i32, i32, i32
  }
}

</mosaic_0001>

<llo_original>
// kernel: tpu_custom_call.1
$region0: #{tpu_custom_call.1}
  #allocation0 [shape = 'u32[]', space=smem, size = 0x4, offset = 0x4, fixed_abs, tag = 'smem constant byte address 0x4 - core index']
  #allocation1 [shape = 'u32[144,128]{1,0:T(1,128)}', space=vmem, size = 0x12000, scoped, tag = 'internal scratch']
  %s0 = inlined_call_operand.hbm [shape: f32[2,8,290], index: 0, kind: input, shape index: {}]
  %s1 = inlined_call_operand.hbm [shape: f32[8,72], index: 1, kind: input, shape index: {}]
  %s2 = inlined_call_operand.hbm [shape: f32[72,256], index: 2, kind: input, shape index: {}]
  %s3 = inlined_call_operand.hbm [shape: f32[2,8,256], index: 3, kind: output, shape index: {}]
  %s4 = sld [smem:[#allocation0]]
  $region34: #{tpu_custom_call.1} parent=0
    _
  %s6 = ssub.s32 1, %s4
  %s7 = scalar_select 0, %s6, %s4
  $region1: #{tpu_custom_call.1} parent=0
    #allocation2 [shape = 'u8[24576]{0}', space=vmem, size = 0x6000, scoped, tag = 'input window, operand 0, single buffered']
    #allocation3 [shape = 's32[1]{0}', space=sflag, size = 0x4, scoped, tag = 'scoped memory for tpu_custom_call.1']
    #allocation4 [shape = 's32[1]{0}', space=sflag, size = 0x4, scoped, tag = 'scoped memory for tpu_custom_call.1']
    #allocation5 [shape = 'u8[4096]{0}', space=vmem, size = 0x1000, scoped, tag = 'input window, operand 1, single buffered']
    #allocation6 [shape = 's32[1]{0}', space=sflag, size = 0x4, scoped, tag = 'scoped memory for tpu_custom_call.1']
    #allocation7 [shape = 'u8[73728]{0}', space=vmem, size = 0x12000, scoped, tag = 'input window, operand 2, single buffered']
    #allocation8 [shape = 'u8[16384]{0}', space=vmem, size = 0x4000, scoped, tag = 'output window, operand 0, single buffered']
    %8 = vsyncpa [#allocation3], 0
    %9 = vsyncpa [#allocation6], 0
    %10 = vsyncpa [#allocation4], 0
    // Predicated region
    $region2: #{tpu_custom_call.1} parent=1 // pred_check
      _
    $region3: #{tpu_custom_call.1} parent=1 // pred_check_branch
      %12 = sbr.rel (0) target = $region5
    $region4: #{tpu_custom_call.1} parent=1 // pred_region
      %s14 = ssub.s32 768, 768
      %15 = vsyncadd [#allocation3], %s14
      %s16 = sshll.u32 [#allocation2], 4
      %s17 = int_to_ptr.vmem [resolvable:$true] %s16
      %22 = dma.hbm_to_vmem [thread:$0]  %s0, 768, %s17, [#allocation3], 384, 384, 24
    $region5: #{tpu_custom_call.1} parent=1 // pred_fallthru
      _
    // Predicated region
    $region6: #{tpu_custom_call.1} parent=1 // pred_check
      _
    $region7: #{tpu_custom_call.1} parent=1 // pred_check_branch
      %24 = sbr.rel (0) target = $region9
    $region8: #{tpu_custom_call.1} parent=1 // pred_region
      %s26 = ssub.s32 128, 128
      %27 = vsyncadd [#allocation6], %s26
      %s29 = sshll.u32 [#allocation5], 4
      %s30 = int_to_ptr.vmem [resolvable:$true] %s29
      %32 = dma.hbm_to_vmem [thread:$0]  %s1, 128, %s30, [#allocation6]
    $region9: #{tpu_custom_call.1} parent=1 // pred_fallthru
      _
    // Predicated region
    $region10: #{tpu_custom_call.1} parent=1 // pred_check
      _
    $region11: #{tpu_custom_call.1} parent=1 // pred_check_branch
      %34 = sbr.rel (0) target = $region13
    $region12: #{tpu_custom_call.1} parent=1 // pred_region
      %s36 = ssub.s32 2304, 2304
      %37 = vsyncadd [#allocation6], %s36
      %s38 = sshll.u32 [#allocation7], 4
      %s39 = int_to_ptr.vmem [resolvable:$true] %s38
      %44 = dma.hbm_to_vmem [thread:$0]  %s2, 2304, %s39, [#allocation6], 256, 256, 16
    $region13: #{tpu_custom_call.1} parent=1 // pred_fallthru
      _
    // Predicated region
    $region14: #{tpu_custom_call.1} parent=1 // pred_check
      _
    $region15: #{tpu_custom_call.1} parent=1 // pred_check_branch
      %46 = sbr.rel (0) target = $region17
    $region16: #{tpu_custom_call.1} parent=1 // pred_region
      %47 = dma.done [#allocation3], 768
    $region17: #{tpu_custom_call.1} parent=1 // pred_fallthru
      _
    // Predicated region
    $region18: #{tpu_custom_call.1} parent=1 // pred_check
      _
    $region19: #{tpu_custom_call.1} parent=1 // pred_check_branch
      %49 = sbr.rel (0) target = $region21
    $region20: #{tpu_custom_call.1} parent=1 // pred_region
      %50 = dma.done [#allocation6], 128
    $region21: #{tpu_custom_call.1} parent=1 // pred_fallthru
      _
    // Predicated region
    $region22: #{tpu_custom_call.1} parent=1 // pred_check
      _
    $region23: #{tpu_custom_call.1} parent=1 // pred_check_branch
      %52 = sbr.rel (0) target = $region25
    $region24: #{tpu_custom_call.1} parent=1 // pred_region
      %53 = dma.done [#allocation6], 2304
    $region25: #{tpu_custom_call.1} parent=1 // pred_fallthru
      _
    %v54 = vld [vmem:[#allocation5] sm:$0xff]
    %v55 = vld [vmem:[#allocation7] sm:$0xff]
    %v56 = vld [vmem:[#allocation7 + $0x8] sm:$0xff]
    %v57 = vld [vmem:[#allocation7 + $0x10] sm:$0xff]
    %v58 = vld [vmem:[#allocation7 + $0x18] sm:$0xff]
    %v59 = vld [vmem:[#allocation7 + $0x20] sm:$0xff]
    %v60 = vld [vmem:[#allocation7 + $0x28] sm:$0xff]
    %v61 = vld [vmem:[#allocation7 + $0x30] sm:$0xff]
    %v62 = vld [vmem:[#allocation7 + $0x38] sm:$0xff]
    %v63 = vld [vmem:[#allocation7 + $0x40] sm:$0xff]
    %v64 = vld [vmem:[#allocation7 + $0x48] sm:$0xff]
    %v65 = vld [vmem:[#allocation7 + $0x50] sm:$0xff]
    %v66 = vld [vmem:[#allocation7 + $0x58] sm:$0xff]
    %v67 = vld [vmem:[#allocation7 + $0x60] sm:$0xff]
    %v68 = vld [vmem:[#allocation7 + $0x68] sm:$0xff]
    %v69 = vld [vmem:[#allocation7 + $0x70] sm:$0xff]
    %v70 = vld [vmem:[#allocation7 + $0x78] sm:$0xff]
    %v71 = vld [vmem:[#allocation7 + $0x80] sm:$0xff]
    %v72 = vld [vmem:[#allocation7 + $0x88] sm:$0xff]
    %v73 = vld [vmem:[#allocation2] sm:$0xff]
    %v74 = vld [vmem:[#allocation2 + $0x8] sm:$0xff]
    %v75 = vld [vmem:[#allocation2 + $0x10] sm:$0xff]
    %79 = vrot.lane.b32.xlu0 %v73, 127
    %v80 = vpop.permute.xlu0 %79
    %81 = vrot.lane.b32.xlu0 %v74, 127
    %v82 = vpop.permute.xlu0 %81
    %83 = vrot.lane.b32.xlu0 %v75, 127
    %v84 = vpop.permute.xlu0 %83
    %vm85 = vcmask 1039360
    %v86 = vsel %vm85, %v80, %v82
    %v87 = vsel %vm85, %v82, %v84
    %90 = vrot.lane.b32.xlu0 %v73, 126
    %v91 = vpop.permute.xlu0 %90
    %92 = vrot.lane.b32.xlu0 %v74, 126
    %v93 = vpop.permute.xlu0 %92
    %94 = vrot.lane.b32.xlu0 %v75, 126
    %v95 = vpop.permute.xlu0 %94
    %vm96 = vcmask 1031168
    %v97 = vsel %vm96, %v91, %v93
    %v98 = vsel %vm96, %v93, %v95
    %101 = vrot.lane.b32.xlu0 %v73, 112
    %v102 = vpop.permute.xlu0 %101
    %103 = vrot.lane.b32.xlu0 %v74, 112
    %v104 = vpop.permute.xlu0 %103
    %105 = vrot.lane.b32.xlu0 %v75, 112
    %v106 = vpop.permute.xlu0 %105
    %vm107 = vcmask 916480
    %v108 = vsel %vm107, %v102, %v104
    %v109 = vsel %vm107, %v104, %v106
    %112 = vrot.lane.b32.xlu0 %v73, 111
    %v113 = vpop.permute.xlu0 %112
    %114 = vrot.lane.b32.xlu0 %v74, 111
    %v115 = vpop.permute.xlu0 %114
    %116 = vrot.lane.b32.xlu0 %v75, 111
    %v117 = vpop.permute.xlu0 %116
    %vm118 = vcmask 908288
    %v119 = vsel %vm118, %v113, %v115
    %v120 = vsel %vm118, %v115, %v117
    %123 = vrot.lane.b32.xlu0 %v73, 110
    %v124 = vpop.permute.xlu0 %123
    %125 = vrot.lane.b32.xlu0 %v74, 110
    %v126 = vpop.permute.xlu0 %125
    %127 = vrot.lane.b32.xlu0 %v75, 110
    %v128 = vpop.permute.xlu0 %127
    %vm129 = vcmask 900096
    %v130 = vsel %vm129, %v124, %v126
    %v131 = vsel %vm129, %v126, %v128
    %134 = vrot.lane.b32.xlu0 %v73, 96
    %v135 = vpop.permute.xlu0 %134
    %136 = vrot.lane.b32.xlu0 %v74, 96
    %v137 = vpop.permute.xlu0 %136
    %138 = vrot.lane.b32.xlu0 %v75, 96
    %v139 = vpop.permute.xlu0 %138
    %vm140 = vcmask 785408
    %v141 = vsel %vm140, %v135, %v137
    %v142 = vsel %vm140, %v137, %v139
    %145 = vrot.lane.b32.xlu0 %v73, 95
    %v146 = vpop.permute.xlu0 %145
    %147 = vrot.lane.b32.xlu0 %v74, 95
    %v148 = vpop.permute.xlu0 %147
    %149 = vrot.lane.b32.xlu0 %v75, 95
    %v150 = vpop.permute.xlu0 %149
    %vm151 = vcmask 777216
    %v152 = vsel %vm151, %v146, %v148
    %v153 = vsel %vm151, %v148, %v150
    %156 = vrot.lane.b32.xlu0 %v73, 94
    %v157 = vpop.permute.xlu0 %156
    %158 = vrot.lane.b32.xlu0 %v74, 94
    %v159 = vpop.permute.xlu0 %158
    %160 = vrot.lane.b32.xlu0 %v75, 94
    %v161 = vpop.permute.xlu0 %160
    %vm162 = vcmask 769024
    %v163 = vsel %vm162, %v157, %v159
    %v164 = vsel %vm162, %v159, %v161
    %v167 = vmul.f32 %v73, %v55
    %v168 = vmul.f32 %v74, %v56
    %v169 = vmul.f32 %v86, %v57
    %v170 = vmul.f32 %v87, %v58
    %v171 = vmul.f32 %v97, %v59
    %v172 = vmul.f32 %v98, %v60
    %v173 = vmul.f32 %v108, %v61
    %v174 = vmul.f32 %v109, %v62
    %v175 = vmul.f32 %v119, %v63
    %v176 = vmul.f32 %v120, %v64
    %v177 = vmul.f32 %v130, %v65
    %v178 = vmul.f32 %v131, %v66
    %v179 = vmul.f32 %v141, %v67
    %v180 = vmul.f32 %v142, %v68
    %v181 = vmul.f32 %v152, %v69
    %v182 = vmul.f32 %v153, %v70
    %v183 = vmul.f32 %v163, %v71
    %v184 = vmul.f32 %v164, %v72
    %vm185 = vcmask 588800
    %v187 = vsel %vm185, %v54, 0
    %189 = vmatprep.subr.mxu0 0.0
    %190 = vmatpush1.msra.mxu0 0.0
    %191 = vmatprep.subr.mxu0 0.0
    %192 = vmatpush1.msra.mxu0 0.0
    %193 = vmatprep.subr.mxu0 0.0
    %194 = vmatpush1.msra.mxu0 0.0
    %195 = vmatprep.subr.mxu0 0.0
    %196 = vmatpush1.msra.mxu0 0.0
    %197 = vmatprep.subr.mxu0 0.0
    %198 = vmatpush1.msra.mxu0 0.0
    %199 = vmatprep.subr.mxu0 0.0
    %200 = vmatpush1.msra.mxu0 0.0
    %201 = vmatprep.subr.mxu0 0.0
    %202 = vmatpush1.msra.mxu0 0.0
    %203 = vmatprep.subr.mxu0 %v184
    %204 = vmatpush1.msra.mxu0 %v183
    %205 = vmatprep.subr.mxu0 %v182
    %206 = vmatpush1.msra.mxu0 %v181
    %207 = vmatprep.subr.mxu0 %v180
    %208 = vmatpush1.msra.mxu0 %v179
    %209 = vmatprep.subr.mxu0 %v178
    %210 = vmatpush1.msra.mxu0 %v177
    %211 = vmatprep.subr.mxu0 %v176
    %212 = vmatpush1.msra.mxu0 %v175
    %213 = vmatprep.subr.mxu0 %v174
    %214 = vmatpush1.msra.mxu0 %v173
    %215 = vmatprep.subr.mxu0 %v172
    %216 = vmatpush1.msra.mxu0 %v171
    %217 = vmatprep.subr.mxu0 %v170
    %218 = vmatpush1.msra.mxu0 %v169
    %219 = vmatprep.subr.mxu0 %v168
    %220 = vmatpush1.msra.mxu0 %v167
    %221 = vmatprep.subr.mxu0 0.0
    %222 = vmatpush2.msra.mxu0 0.0
    %223 = vmatprep.subr.mxu0 0.0
    %224 = vmatpush2.msra.mxu0 0.0
    %225 = vmatprep.subr.mxu0 0.0
    %226 = vmatpush2.msra.mxu0 0.0
    %227 = vmatprep.subr.mxu0 0.0
    %228 = vmatpush2.msra.mxu0 0.0
    %229 = vmatprep.subr.mxu0 0.0
    %230 = vmatpush2.msra.mxu0 0.0
    %231 = vmatprep.subr.mxu0 0.0
    %232 = vmatpush2.msra.mxu0 0.0
    %233 = vmatprep.subr.mxu0 0.0
    %234 = vmatpush2.msra.mxu0 0.0
    %235 = vmatprep.subr.mxu0 0.0
    %236 = vmatpush2.msra.mxu0 0.0
    %237 = vmatprep.subr.mxu0 0.0
    %238 = vmatpush2.msra.mxu0 0.0
    %239 = vmatprep.subr.mxu0 0.0
    %240 = vmatpush2.msra.mxu0 0.0
    %241 = vmatprep.subr.mxu0 0.0
    %242 = vmatpush2.msra.mxu0 0.0
    %243 = vmatprep.subr.mxu0 0.0
    %244 = vmatpush2.msra.mxu0 0.0
    %245 = vmatprep.subr.mxu0 0.0
    %246 = vmatpush2.msra.mxu0 0.0
    %247 = vmatprep.subr.mxu0 0.0
    %248 = vmatpush2.msra.mxu0 0.0
    %249 = vmatprep.subr.mxu0 0.0
    %250 = vmatpush2.msra.mxu0 0.0
    %251 = vmatprep.subr.mxu0 0.0
    %252 = vmatpush2.msra.mxu0 0.0
    %253 = vmatprep.mubr.f32.mxu0 0.0
    %254 = vmatmul.mubr.f32.gmra.mxu0 %v187
    %v255 = vpop.f32.mrf.mxu0
    %v256 = vadd.f32 0.0, %v255
    %v257 = vpop.f32.mrf.mxu0
    %v258 = vadd.f32 0.0, %v257
    %259 = vdwg.mxu0
    %v260 = vadd.f32 %v256, %v258
    %261 = vadd.xlane.f32.xlu0 %v260
    %v262 = vpop.xlane.xlu0 %261
    %v263 = vrcp.pop 256.0
    %v264 = vmul.f32 %v262, %v263
    %v265 = vsub.f32 %v256, %v264
    %v266 = vsub.f32 %v258, %v264
    %v267 = vmul.f32 %v265, %v265
    %v268 = vmul.f32 %v266, %v266
    %v269 = vadd.f32 %v267, %v268
    %270 = vadd.xlane.f32.xlu0 %v269
    %v271 = vpop.xlane.xlu0 %270
    %v272 = vmul.f32 %v271, %v263
    %v273 = vadd.f32 %v272, 1e-05
    %v274 = vrsqrt.pop %v273
    %v275 = vmul.f32 %v265, %v274
    %v276 = vmul.f32 %v266, %v274
    %v277 = vmax.f32 %v275, 0.0
    %v278 = vmax.f32 %v276, 0.0
    %279 = vst [vmem:[#allocation8] sm:$0xff] %v277
    %280 = vst [vmem:[#allocation8 + $0x8] sm:$0xff] %v278
    %s281 = scalar_lea.vmem [#allocation2], 24
    %v282 = vld [vmem:[%s281] sm:$0xff]
    %v283 = vld [vmem:[%s281 + $0x8] sm:$0xff]
    %v284 = vld [vmem:[%s281 + $0x10] sm:$0xff]
    %288 = vrot.lane.b32.xlu0 %v282, 127
    %v289 = vpop.permute.xlu0 %288
    %290 = vrot.lane.b32.xlu0 %v283, 127
    %v291 = vpop.permute.xlu0 %290
    %292 = vrot.lane.b32.xlu0 %v284, 127
    %v293 = vpop.permute.xlu0 %292
    %v294 = vsel %vm85, %v289, %v291
    %v295 = vsel %vm85, %v291, %v293
    %298 = vrot.lane.b32.xlu0 %v282, 126
    %v299 = vpop.permute.xlu0 %298
    %300 = vrot.lane.b32.xlu0 %v283, 126
    %v301 = vpop.permute.xlu0 %300
    %302 = vrot.lane.b32.xlu0 %v284, 126
    %v303 = vpop.permute.xlu0 %302
    %v304 = vsel %vm96, %v299, %v301
    %v305 = vsel %vm96, %v301, %v303
    %308 = vrot.lane.b32.xlu0 %v282, 112
    %v309 = vpop.permute.xlu0 %308
    %310 = vrot.lane.b32.xlu0 %v283, 112
    %v311 = vpop.permute.xlu0 %310
    %312 = vrot.lane.b32.xlu0 %v284, 112
    %v313 = vpop.permute.xlu0 %312
    %v314 = vsel %vm107, %v309, %v311
    %v315 = vsel %vm107, %v311, %v313
    %318 = vrot.lane.b32.xlu0 %v282, 111
    %v319 = vpop.permute.xlu0 %318
    %320 = vrot.lane.b32.xlu0 %v283, 111
    %v321 = vpop.permute.xlu0 %320
    %322 = vrot.lane.b32.xlu0 %v284, 111
    %v323 = vpop.permute.xlu0 %322
    %v324 = vsel %vm118, %v319, %v321
    %v325 = vsel %vm118, %v321, %v323
    %328 = vrot.lane.b32.xlu0 %v282, 110
    %v329 = vpop.permute.xlu0 %328
    %330 = vrot.lane.b32.xlu0 %v283, 110
    %v331 = vpop.permute.xlu0 %330
    %332 = vrot.lane.b32.xlu0 %v284, 110
    %v333 = vpop.permute.xlu0 %332
    %v334 = vsel %vm129, %v329, %v331
    %v335 = vsel %vm129, %v331, %v333
    %338 = vrot.lane.b32.xlu0 %v282, 96
    %v339 = vpop.permute.xlu0 %338
    %340 = vrot.lane.b32.xlu0 %v283, 96
    %v341 = vpop.permute.xlu0 %340
    %342 = vrot.lane.b32.xlu0 %v284, 96
    %v343 = vpop.permute.xlu0 %342
    %v344 = vsel %vm140, %v339, %v341
    %v345 = vsel %vm140, %v341, %v343
    %348 = vrot.lane.b32.xlu0 %v282, 95
    %v349 = vpop.permute.xlu0 %348
    %350 = vrot.lane.b32.xlu0 %v283, 95
    %v351 = vpop.permute.xlu0 %350
    %352 = vrot.lane.b32.xlu0 %v284, 95
    %v353 = vpop.permute.xlu0 %352
    %v354 = vsel %vm151, %v349, %v351
    %v355 = vsel %vm151, %v351, %v353
    %358 = vrot.lane.b32.xlu0 %v282, 94
    %v359 = vpop.permute.xlu0 %358
    %360 = vrot.lane.b32.xlu0 %v283, 94
    %v361 = vpop.permute.xlu0 %360
    %362 = vrot.lane.b32.xlu0 %v284, 94
    %v363 = vpop.permute.xlu0 %362
    %v364 = vsel %vm162, %v359, %v361
    %v365 = vsel %vm162, %v361, %v363
    %v368 = vmul.f32 %v282, %v55
    %v369 = vmul.f32 %v283, %v56
    %v370 = vmul.f32 %v294, %v57
    %v371 = vmul.f32 %v295, %v58
    %v372 = vmul.f32 %v304, %v59
    %v373 = vmul.f32 %v305, %v60
    %v374 = vmul.f32 %v314, %v61
    %v375 = vmul.f32 %v315, %v62
    %v376 = vmul.f32 %v324, %v63
    %v377 = vmul.f32 %v325, %v64
    %v378 = vmul.f32 %v334, %v65
    %v379 = vmul.f32 %v335, %v66
    %v380 = vmul.f32 %v344, %v67
    %v381 = vmul.f32 %v345, %v68
    %v382 = vmul.f32 %v354, %v69
    %v383 = vmul.f32 %v355, %v70
    %v384 = vmul.f32 %v364, %v71
    %v385 = vmul.f32 %v365, %v72
    %386 = vmatprep.subr.mxu0 0.0
    %387 = vmatpush1.msra.mxu0 0.0
    %388 = vmatprep.subr.mxu0 0.0
    %389 = vmatpush1.msra.mxu0 0.0
    %390 = vmatprep.subr.mxu0 0.0
    %391 = vmatpush1.msra.mxu0 0.0
    %392 = vmatprep.subr.mxu0 0.0
    %393 = vmatpush1.msra.mxu0 0.0
    %394 = vmatprep.subr.mxu0 0.0
    %395 = vmatpush1.msra.mxu0 0.0
    %396 = vmatprep.subr.mxu0 0.0
    %397 = vmatpush1.msra.mxu0 0.0
    %398 = vmatprep.subr.mxu0 0.0
    %399 = vmatpush1.msra.mxu0 0.0
    %400 = vmatprep.subr.mxu0 %v385
    %401 = vmatpush1.msra.mxu0 %v384
    %402 = vmatprep.subr.mxu0 %v383
    %403 = vmatpush1.msra.mxu0 %v382
    %404 = vmatprep.subr.mxu0 %v381
    %405 = vmatpush1.msra.mxu0 %v380
    %406 = vmatprep.subr.mxu0 %v379
    %407 = vmatpush1.msra.mxu0 %v378
    %408 = vmatprep.subr.mxu0 %v377
    %409 = vmatpush1.msra.mxu0 %v376
    %410 = vmatprep.subr.mxu0 %v375
    %411 = vmatpush1.msra.mxu0 %v374
    %412 = vmatprep.subr.mxu0 %v373
    %413 = vmatpush1.msra.mxu0 %v372
    %414 = vmatprep.subr.mxu0 %v371
    %415 = vmatpush1.msra.mxu0 %v370
    %416 = vmatprep.subr.mxu0 %v369
    %417 = vmatpush1.msra.mxu0 %v368
    %418 = vmatprep.subr.mxu0 0.0
    %419 = vmatpush2.msra.mxu0 0.0
    %420 = vmatprep.subr.mxu0 0.0
    %421 = vmatpush2.msra.mxu0 0.0
    %422 = vmatprep.subr.mxu0 0.0
    %423 = vmatpush2.msra.mxu0 0.0
    %424 = vmatprep.subr.mxu0 0.0
    %425 = vmatpush2.msra.mxu0 0.0
    %426 = vmatprep.subr.mxu0 0.0
    %427 = vmatpush2.msra.mxu0 0.0
    %428 = vmatprep.subr.mxu0 0.0
    %429 = vmatpush2.msra.mxu0 0.0
    %430 = vmatprep.subr.mxu0 0.0
    %431 = vmatpush2.msra.mxu0 0.0
    %432 = vmatprep.subr.mxu0 0.0
    %433 = vmatpush2.msra.mxu0 0.0
    %434 = vmatprep.subr.mxu0 0.0
    %435 = vmatpush2.msra.mxu0 0.0
    %436 = vmatprep.subr.mxu0 0.0
    %437 = vmatpush2.msra.mxu0 0.0
    %438 = vmatprep.subr.mxu0 0.0
    %439 = vmatpush2.msra.mxu0 0.0
    %440 = vmatprep.subr.mxu0 0.0
    %441 = vmatpush2.msra.mxu0 0.0
    %442 = vmatprep.subr.mxu0 0.0
    %443 = vmatpush2.msra.mxu0 0.0
    %444 = vmatprep.subr.mxu0 0.0
    %445 = vmatpush2.msra.mxu0 0.0
    %446 = vmatprep.subr.mxu0 0.0
    %447 = vmatpush2.msra.mxu0 0.0
    %448 = vmatprep.subr.mxu0 0.0
    %449 = vmatpush2.msra.mxu0 0.0
    %450 = vmatprep.mubr.f32.mxu0 0.0
    %451 = vmatmul.mubr.f32.gmra.mxu0 %v187
    %v452 = vpop.f32.mrf.mxu0
    %v453 = vadd.f32 0.0, %v452
    %v454 = vpop.f32.mrf.mxu0
    %v455 = vadd.f32 0.0, %v454
    %456 = vdwg.mxu0
    %v457 = vadd.f32 %v453, %v455
    %458 = vadd.xlane.f32.xlu0 %v457
    %v459 = vpop.xlane.xlu0 %458
    %v460 = vmul.f32 %v459, %v263
    %v461 = vsub.f32 %v453, %v460
    %v462 = vsub.f32 %v455, %v460
    %v463 = vmul.f32 %v461, %v461
    %v464 = vmul.f32 %v462, %v462
    %v465 = vadd.f32 %v463, %v464
    %466 = vadd.xlane.f32.xlu0 %v465
    %v467 = vpop.xlane.xlu0 %466
    %v468 = vmul.f32 %v467, %v263
    %v469 = vadd.f32 %v468, 1e-05
    %v470 = vrsqrt.pop %v469
    %v471 = vmul.f32 %v461, %v470
    %v472 = vmul.f32 %v462, %v470
    %v473 = vmax.f32 %v471, 0.0
    %v474 = vmax.f32 %v472, 0.0
    %s475 = scalar_lea.vmem [#allocation8], 16
    %476 = vst [vmem:[%s475] sm:$0xff] %v473
    %477 = vst [vmem:[%s475 + $0x8] sm:$0xff] %v474
    // Predicated region
    $region26: #{tpu_custom_call.1} parent=1 // pred_check
      _
    $region27: #{tpu_custom_call.1} parent=1 // pred_check_branch
      %479 = sbr.rel (0) target = $region29
    $region28: #{tpu_custom_call.1} parent=1 // pred_region
      %s481 = ssub.s32 512, 512
      %482 = vsyncadd [#allocation4], %s481
      %s483 = sshll.u32 [#allocation8], 4
      %s484 = int_to_ptr.vmem [resolvable:$true] %s483
      %489 = dma.vmem_to_hbm [thread:$0]  %s484, 512, %s3, [#allocation4], 256, 256, 16
    $region29: #{tpu_custom_call.1} parent=1 // pred_fallthru
      _
    // Predicated region
    $region30: #{tpu_custom_call.1} parent=1 // pred_check
      _
    $region31: #{tpu_custom_call.1} parent=1 // pred_check_branch
      %491 = sbr.rel (0) target = $region33
    $region32: #{tpu_custom_call.1} parent=1 // pred_region
      %492 = dma.done [#allocation4], 512
    $region33: #{tpu_custom_call.1} parent=1 // pred_fallthru
      _
    %493 = vsyncpa [#allocation3], 1
    %494 = vsyncpa [#allocation6], 1
    %495 = vsyncpa [#allocation4], 1

</llo_original>
